<compile_context>
chip_gen: v7x
topology: tpu7x:2x2x1
jax: 0.10.0
libtpu: 0.0.40
codegen_flags: <defaults>
</compile_context>

<pallas_src>
import functools

import jax
import jax.numpy as jnp
from jax import lax
from jax.experimental import pallas as pl
from jax.experimental.pallas import tpu as pltpu


def _round_up(x, m):
    return ((x + m - 1) // m) * m


def _per_row_focal(logits, tgt_i32, gamma):
    """Per-tile focal loss.

    logits: (TN, C) float (any width; widened to f32 here), tgt_i32: (TN, 1) i32.
    Returns (TN, 1) f32 per-row focal losses (unmasked).
    """
    logits_f32 = logits.astype(jnp.float32)
    tn, c = logits_f32.shape
    m = jnp.max(logits_f32, axis=-1, keepdims=True)                  # (TN, 1)
    shifted = logits_f32 - m                                          # (TN, C)
    sumexp = jnp.sum(jnp.exp(shifted), axis=-1, keepdims=True)        # (TN, 1)

    # Fold the target gather into the shifted logits: one cmp+select over the
    # tile (no f32 one-hot materialized, no +m/-m round trip).
    col = lax.broadcasted_iota(jnp.int32, (tn, c), 1)                 # (TN, C)
    tgt_shifted = jnp.sum(jnp.where(col == tgt_i32, shifted, 0.0),
                          axis=-1, keepdims=True)                     # (TN, 1)

    ce = jnp.log(sumexp) - tgt_shifted                                # >= 0
    pt = jnp.exp(-ce)
    one_minus_pt = jnp.clip(1.0 - pt, 0.0, 1.0)  # guard pt > 1 from rounding

    g = float(gamma)
    if g == int(g) and 0 <= int(g) <= 8:
        # integer gamma: plain VALU multiplies, no transcendental pow, no NaN.
        w = jnp.ones_like(one_minus_pt)
        for _ in range(int(g)):
            w = w * one_minus_pt
    else:
        w = jnp.power(one_minus_pt, g)
    return w * ce


def _focal_partial_kernel(logits_ref, targets_ref, partial_ref, *,
                          gamma, n_valid, block_n):
    """One tile -> one f32 partial sum (batch axis is 'parallel')."""
    i = pl.program_id(0)
    focal = _per_row_focal(logits_ref[...], targets_ref[...], gamma)  # (TN, 1)

    # Mask rows past the true batch size (ragged last tile reads undefined data).
    row = i * block_n + lax.broadcasted_iota(jnp.int32, focal.shape, 0)
    focal = jnp.where(row < n_valid, focal, 0.0)

    partial_ref[...] = jnp.sum(focal, axis=(0, 1),
                               keepdims=True).reshape(1, 1, 1)


def _focal_none_kernel(logits_ref, targets_ref, out_ref, *,
                       gamma, n_valid, block_n):
    i = pl.program_id(0)
    focal = _per_row_focal(logits_ref[...], targets_ref[...], gamma)  # (TN, 1)
    row = i * block_n + lax.broadcasted_iota(jnp.int32, focal.shape, 0)
    out_ref[...] = jnp.where(row < n_valid, focal, 0.0)


def focal_loss(inputs, targets, gamma=2.0, reduction="mean", block_n=None):
    """inputs: (N, C) logits (f32 or bf16), targets: (N,) int class indices."""
    n, c = inputs.shape
    itemsize = jnp.dtype(inputs.dtype).itemsize
    # Sublane-packing granule: 8 rows for 4-byte, 16 for bf16, 32 for int8/fp8.
    row_align = max(8, 32 // itemsize)

    if block_n is None:
        # Size the row tile from the *f32* working set (the kernel materializes
        # f32 temporaries of the (TN, C) tile), with C rounded up to 128 lanes.
        # ~4 MiB per slab keeps 2x input buffers + ~3x f32 temporaries + targets
        # comfortably under a 32 MiB scoped-VMEM limit on every generation
        # (v7x physical VMEM is only 64 MiB) while staying above the ~512-row
        # DMA-efficiency knee for modest C.
        c_lanes = _round_up(c, 128)
        per_slab_budget = 4 * 1024 * 1024
        block_n = per_slab_budget // (c_lanes * 4)
        block_n = max(row_align, min(1024, (block_n // row_align) * row_align))
    block_n = min(block_n, _round_up(n, row_align))
    block_n = max(row_align, (block_n // row_align) * row_align)

    # No padding of the logits: ragged N handled by partial blocks + row mask.
    num_tiles = pl.cdiv(n, block_n)
    targets2d = targets.astype(jnp.int32).reshape(n, 1)

    in_specs = [
        pl.BlockSpec((block_n, c), lambda i: (i, 0)),
        pl.BlockSpec((block_n, 1), lambda i: (i, 0)),
    ]

    if reduction in ("mean", "sum"):
        kernel = functools.partial(_focal_partial_kernel, gamma=float(gamma),
                                   n_valid=n, block_n=block_n)
        partials = pl.pallas_call(
            kernel,
            out_shape=jax.ShapeDtypeStruct((num_tiles, 1, 1), jnp.float32),
            grid_spec=pltpu.PrefetchScalarGridSpec(
                num_scalar_prefetch=0,
                grid=(num_tiles,),
                in_specs=in_specs,
                out_specs=pl.BlockSpec((1, 1, 1), lambda i: (i, 0, 0)),
            ),
            compiler_params=pltpu.CompilerParams(
                dimension_semantics=("parallel",),
                vmem_limit_bytes=32 * 1024 * 1024,
            ),
        )(inputs, targets2d)
        total = jnp.sum(partials)
        if reduction == "mean":
            return total / jnp.float32(n)
        return total

    # reduction == 'none'
    kernel = functools.partial(_focal_none_kernel, gamma=float(gamma),
                               n_valid=n, block_n=block_n)
    result = pl.pallas_call(
        kernel,
        out_shape=jax.ShapeDtypeStruct((n, 1), jnp.float32),
        grid_spec=pltpu.PrefetchScalarGridSpec(
            num_scalar_prefetch=0,
            grid=(num_tiles,),
            in_specs=in_specs,
            out_specs=pl.BlockSpec((block_n, 1), lambda i: (i, 0)),
        ),
        compiler_params=pltpu.CompilerParams(
            dimension_semantics=("parallel",),
            vmem_limit_bytes=32 * 1024 * 1024,
        ),
    )(inputs, targets2d)
    return result[:, 0]


def _ref_focal(logits, targets, gamma, reduction):
    lp = jax.nn.log_softmax(logits.astype(jnp.float32), axis=-1)
    ce = -jnp.take_along_axis(lp, targets[:, None].astype(jnp.int32), axis=-1)[:, 0]
    pt = jnp.exp(-ce)
    fl = (1.0 - pt) ** gamma * ce
    if reduction == "mean":
        return fl.mean()
    if reduction == "sum":
        return fl.sum()
    return fl


if __name__ == "__main__":
    key = jax.random.PRNGKey(0)
    k1, k2, k3, k4, k5, k6 = jax.random.split(key, 6)

    # Case 1: f32 logits, mean reduction (matches the PyTorch default config).
    N, C = 8, 16
    logits = jax.random.normal(k1, (N, C), dtype=jnp.float32)
    targets = jax.random.randint(k2, (N,), 0, C, dtype=jnp.int32)
    loss = focal_loss(logits, targets, gamma=2.0, reduction="mean")
    jax.block_until_ready(loss)
    ref = _ref_focal(logits, targets, 2.0, "mean")
    assert jnp.allclose(loss, ref, rtol=1e-5, atol=1e-5), (loss, ref)

    # Case 2: ragged N (tail-masking path, no logits pad), 'sum' and 'none'.
    N2 = 13
    logits2 = jax.random.normal(k3, (N2, C), dtype=jnp.float32)
    targets2 = jax.random.randint(k4, (N2,), 0, C, dtype=jnp.int32)
    loss_sum = focal_loss(logits2, targets2, gamma=2.0, reduction="sum")
    loss_none = focal_loss(logits2, targets2, gamma=2.0, reduction="none")
    jax.block_until_ready((loss_sum, loss_none))
    assert jnp.allclose(loss_sum, _ref_focal(logits2, targets2, 2.0, "sum"),
                        rtol=1e-5, atol=1e-5)
    assert jnp.allclose(loss_none, _ref_focal(logits2, targets2, 2.0, "none"),
                        rtol=1e-5, atol=1e-5)

    # Case 3: bf16 logits stay bf16 end-to-end (HBM traffic halved).
    logits_bf16 = logits.astype(jnp.bfloat16)
    loss_bf16 = focal_loss(logits_bf16, targets, gamma=2.0, reduction="mean")
    jax.block_until_ready(loss_bf16)
    ref_bf16 = _ref_focal(logits_bf16, targets, 2.0, "mean")
    assert jnp.allclose(loss_bf16, ref_bf16, rtol=1e-5, atol=1e-5)

    # Case 4: multi-tile grid + ragged tail exercising the parallel partial-sum
    # path (forced small block_n), both reductions.
    N3 = 300
    logits3 = jax.random.normal(k5, (N3, C), dtype=jnp.float32)
    targets3 = jax.random.randint(k6, (N3,), 0, C, dtype=jnp.int32)
    loss3_mean = focal_loss(logits3, targets3, gamma=2.0, reduction="mean",
                            block_n=64)
    loss3_none = focal_loss(logits3, targets3, gamma=2.0, reduction="none",
                            block_n=64)
    jax.block_until_ready((loss3_mean, loss3_none))
    assert jnp.allclose(loss3_mean, _ref_focal(logits3, targets3, 2.0, "mean"),
                        rtol=1e-5, atol=1e-5)
    assert jnp.allclose(loss3_none, _ref_focal(logits3, targets3, 2.0, "none"),
                        rtol=1e-5, atol=1e-5)

    print("KERNEL_OK")
</pallas_src>

<mosaic_0001>
module attributes {stable_mosaic.version = 11 : i64} {
  func.func @_focal_partial_kernel(%arg0: i32, %arg1: memref<8x16xf32, #tpu.memory_space<vmem>>, %arg2: memref<8x1xi32, #tpu.memory_space<vmem>>, %arg3: memref<1x1x1xf32, #tpu.memory_space<vmem>>) attributes {dimension_semantics = [#tpu.dimension_semantics<parallel>], iteration_bounds = array<i64: 1>, scalar_prefetch = 0 : i64, scratch_operands = 0 : i64, tpu.core_type = #tpu.core_type<tc>, window_params = [{transform_indices = @transform_0, window_bounds = array<i64: 8, 16>}, {transform_indices = @transform_1, window_bounds = array<i64: 8, 1>}, {transform_indices = @transform_2, window_bounds = array<i64: 1, 1, 1>}]} {
    %c0 = arith.constant 0 : index
    %c0_0 = arith.constant 0 : index
    %0 = vector.load %arg1[%c0, %c0_0] : memref<8x16xf32, #tpu.memory_space<vmem>>, vector<8x16xf32>
    %c0_1 = arith.constant 0 : index
    %c0_2 = arith.constant 0 : index
    %1 = vector.load %arg2[%c0_1, %c0_2] : memref<8x1xi32, #tpu.memory_space<vmem>>, vector<8x1xi32>
    %cst = arith.constant dense<0xFF800000> : vector<8xf32>
    %2 = vector.multi_reduction <maximumf>, %0, %cst [1] : vector<8x16xf32> to vector<8xf32>
    %3 = vector.shape_cast %2 : vector<8xf32> to vector<8x1xf32>
    %4 = vector.broadcast %3 : vector<8x1xf32> to vector<8x16xf32>
    %5 = arith.subf %0, %4 : vector<8x16xf32>
    %6 = math.exp %5 : vector<8x16xf32>
    %cst_3 = arith.constant dense<0.000000e+00> : vector<8xf32>
    %7 = vector.multi_reduction <add>, %6, %cst_3 [1] : vector<8x16xf32> to vector<8xf32>
    %8 = vector.shape_cast %7 : vector<8xf32> to vector<8x1xf32>
    %9 = tpu.iota {dimensions = array<i32: 1>} : vector<8x16xi32>
    %10 = vector.broadcast %1 : vector<8x1xi32> to vector<8x16xi32>
    %11 = arith.cmpi eq, %9, %10 : vector<8x16xi32>
    %cst_4 = arith.constant 0.000000e+00 : f32
    %12 = vector.broadcast %cst_4 : f32 to vector<8x16xf32>
    %13 = arith.select %11, %5, %12 : vector<8x16xi1>, vector<8x16xf32>
    %cst_5 = arith.constant dense<0.000000e+00> : vector<8xf32>
    %14 = vector.multi_reduction <add>, %13, %cst_5 [1] : vector<8x16xf32> to vector<8xf32>
    %15 = vector.shape_cast %14 : vector<8xf32> to vector<8x1xf32>
    %16 = math.log %8 : vector<8x1xf32>
    %17 = arith.subf %16, %15 : vector<8x1xf32>
    %cst_6 = arith.constant 0.000000e+00 : f32
    %18 = vector.broadcast %cst_6 : f32 to vector<8x1xf32>
    %19 = arith.subf %18, %17 : vector<8x1xf32>
    %20 = math.exp %19 : vector<8x1xf32>
    %cst_7 = arith.constant 1.000000e+00 : f32
    %21 = vector.broadcast %cst_7 : f32 to vector<8x1xf32>
    %22 = arith.subf %21, %20 : vector<8x1xf32>
    %cst_8 = arith.constant 0.000000e+00 : f32
    %cst_9 = arith.constant 1.000000e+00 : f32
    %23 = vector.broadcast %cst_8 : f32 to vector<8x1xf32>
    %24 = arith.maximumf %23, %22 : vector<8x1xf32>
    %25 = vector.broadcast %cst_9 : f32 to vector<8x1xf32>
    %26 = arith.minimumf %25, %24 : vector<8x1xf32>
    %cst_10 = arith.constant 1.000000e+00 : f32
    %27 = vector.broadcast %cst_10 : f32 to vector<8x1xf32>
    %28 = arith.mulf %27, %26 : vector<8x1xf32>
    %29 = arith.mulf %28, %26 : vector<8x1xf32>
    %30 = arith.mulf %29, %17 : vector<8x1xf32>
    %c8_i32 = arith.constant 8 : i32
    %31 = arith.muli %arg0, %c8_i32 : i32
    %32 = tpu.iota {dimensions = array<i32: 0>} : vector<8x1xi32>
    %33 = vector.broadcast %31 : i32 to vector<8x1xi32>
    %34 = arith.addi %33, %32 : vector<8x1xi32>
    %c8_i32_11 = arith.constant 8 : i32
    %35 = vector.broadcast %c8_i32_11 : i32 to vector<8x1xi32>
    %36 = arith.cmpi slt, %34, %35 : vector<8x1xi32>
    %cst_12 = arith.constant 0.000000e+00 : f32
    %37 = vector.broadcast %cst_12 : f32 to vector<8x1xf32>
    %38 = arith.select %36, %30, %37 : vector<8x1xi1>, vector<8x1xf32>
    %39 = vector.shape_cast %38 : vector<8x1xf32> to vector<1x8x1xf32>
    %cst_13 = arith.constant dense<0.000000e+00> : vector<1xf32>
    %40 = vector.multi_reduction <add>, %39, %cst_13 [1, 2] : vector<1x8x1xf32> to vector<1xf32>
    %41 = vector.shape_cast %40 : vector<1xf32> to vector<1x1x1xf32>
    %42 = vector.extract %41[0, 0, 0] : f32 from vector<1x1x1xf32>
    %43 = vector.broadcast %42 : f32 to vector<1x1xf32>
    %44 = vector.shape_cast %43 : vector<1x1xf32> to vector<1x1x1xf32>
    %c0_14 = arith.constant 0 : index
    %c0_15 = arith.constant 0 : index
    %c0_16 = arith.constant 0 : index
    %45 = vector.load %arg3[%c0_14, %c0_15, %c0_16] : memref<1x1x1xf32, #tpu.memory_space<vmem>>, vector<1x1x1xf32>
    tpu.vector_store %arg3[%c0_14, %c0_15, %c0_16], %44 {strides = array<i32>} : memref<1x1x1xf32, #tpu.memory_space<vmem>>, vector<1x1x1xf32>,
    return
  }
  func.func @transform_0(%arg0: i32) -> (i32, i32) {
    %c0_i32 = arith.constant 0 : i32
    %c0_i32_0 = arith.constant 0 : i32
    return %arg0, %c0_i32 : i32, i32
  }
  func.func @transform_1(%arg0: i32) -> (i32, i32) {
    %c0_i32 = arith.constant 0 : i32
    %c0_i32_0 = arith.constant 0 : i32
    return %arg0, %c0_i32 : i32, i32
  }
  func.func @transform_2(%arg0: i32) -> (i32, i32, i32) {
    %c0_i32 = arith.constant 0 : i32
    %c0_i32_0 = arith.constant 0 : i32
    %c0_i32_1 = arith.constant 0 : i32
    return %arg0, %c0_i32, %c0_i32_0 : i32, i32, i32
  }
}

</mosaic_0001>

<llo_original>
// kernel: tpu_custom_call.1
$region0: #{tpu_custom_call.1}
  #allocation0 [shape = 'u32[]', space=smem, size = 0x4, offset = 0x4, fixed_abs, tag = 'smem constant byte address 0x4 - core index']
  #allocation1 [shape = 'u32[144,128]{1,0:T(1,128)}', space=vmem, size = 0x12000, scoped, tag = 'internal scratch']
  %s0 = inlined_call_operand.vmem [shape: f32[8,16], index: 0, kind: input, shape index: {}]
  %s1 = inlined_call_operand.vmem [shape: s32[8,1], index: 1, kind: input, shape index: {}]
  %s2 = inlined_call_operand.hbm [shape: f32[1,1,1], index: 2, kind: output, shape index: {}]
  %s3 = sld [smem:[#allocation0]]
  $region18: #{tpu_custom_call.1} parent=0
    _
  %s5 = ssub.s32 1, %s3
  %s6 = scalar_select 0, %s5, %s3
  $region1: #{tpu_custom_call.1} parent=0
    #allocation2 [shape = 'u8[512]{0}', space=vmem, size = 0x400, scoped, tag = 'output window, operand 0, single buffered']
    #allocation3 [shape = 's32[1]{0}', space=sflag, size = 0x4, scoped, tag = 'scoped memory for tpu_custom_call.1']
    %7 = vsyncpa [#allocation3], 0
    // Predicated region
    $region2: #{tpu_custom_call.1} parent=1 // pred_check
      _
    $region3: #{tpu_custom_call.1} parent=1 // pred_check_branch
      %9 = sbr.rel (0) target = $region5
    $region4: #{tpu_custom_call.1} parent=1 // pred_region
      _
    $region5: #{tpu_custom_call.1} parent=1 // pred_fallthru
      _
    // Predicated region
    $region6: #{tpu_custom_call.1} parent=1 // pred_check
      _
    $region7: #{tpu_custom_call.1} parent=1 // pred_check_branch
      %11 = sbr.rel (0) target = $region9
    $region8: #{tpu_custom_call.1} parent=1 // pred_region
      _
    $region9: #{tpu_custom_call.1} parent=1 // pred_fallthru
      _
    %v12 = vld [vmem:[%s0] sm:$0xff]
    %v13 = vld [vmem:[%s1] sm:$0xff]
    %vm14 = vcmask 130048
    %v15 = vsel %vm14, %v12, -inf
    %16 = vmax.xlane.f32.xlu0 %v15
    %v17 = vpop.xlane.xlu0 %16
    %v18 = vsub.f32 %v12, %v17
    %v19 = vmul.f32 %v18, 1.442695
    %v20 = vpow.pop %v19
    %v21 = vsel %vm14, %v20, 0.0
    %22 = vadd.xlane.f32.xlu0 %v21
    %v23 = vpop.xlane.xlu0 %22
    %v24 = vlaneseq
    %v25 = vand.u32 %v24, 127
    %26 = vset.pattern.permute.xlu0 0
    %27 = vperm.xlu0 %26, %v13
    %v28 = vpop.permute.xlu0 %27
    %vm29 = vcmp.eq.s32.totalorder %v25, %v28
    %v30 = vsel %vm29, %v18, 0.0
    %v31 = vsel %vm14, %v30, 0.0
    %32 = vadd.xlane.f32.xlu0 %v31
    %v33 = vpop.xlane.xlu0 %32
    %v34 = vlog2.pop %v23
    %v35 = vmul.f32 %v34, 0.6931472
    %v36 = vsub.f32 %v35, %v33
    %v37 = vsub.f32 0.0, %v36
    %v38 = vmul.f32 %v37, 1.442695
    %v39 = vpow.pop %v38
    %v40 = vsub.f32 1.0, %v39
    %v41 = vmax.f32 %v40, 0.0
    %v42 = vmin.f32 %v41, 1.0
    %v43 = vmul.f32 %v42, %v42
    %v44 = vmul.f32 %v43, %v36
    %s45 = smul.u32 0, 8
    %v46 = vlaneseq
    %v47 = vshrl.u32 %v46, 7
    %v48 = vstv %s45
    %v49 = vadd.s32 %v48, %v47
    %vm50 = vcmp.lt.s32.totalorder %v49, 8
    %v51 = vsel %vm50, %v44, 0.0
    %vm52 = vcmask 7168
    %v53 = vsel %vm52, %v51, 0.0
    %54 = vadd.xlane.f32.xlu0 %v53
    %v55 = vpop.xlane.xlu0 %54
    %v56 = vrot.slane %v55, 4
    %v57 = vadd.f32 %v55, %v56
    %v58 = vrot.slane %v57, 2
    %v59 = vadd.f32 %v57, %v58
    %v60 = vrot.slane %v59, 1
    %v61 = vadd.f32 %v59, %v60
    %s62 = vtos %v61
    %v63 = vstv %s62
    %vm64 = vcmask 0
    %65 = vst.msk [vmem:[#allocation2] sm:$0x1] %vm64, %v63
    // Predicated region
    $region10: #{tpu_custom_call.1} parent=1 // pred_check
      _
    $region11: #{tpu_custom_call.1} parent=1 // pred_check_branch
      %67 = sbr.rel (0) target = $region13
    $region12: #{tpu_custom_call.1} parent=1 // pred_region
      %s69 = ssub.s32 16, 16
      %70 = vsyncadd [#allocation3], %s69
      %s72 = sshll.u32 [#allocation2], 4
      %s73 = int_to_ptr.vmem [resolvable:$true] %s72
      %75 = dma.vmem_to_hbm [thread:$0]  %s73, 16, %s2, [#allocation3]
    $region13: #{tpu_custom_call.1} parent=1 // pred_fallthru
      _
    // Predicated region
    $region14: #{tpu_custom_call.1} parent=1 // pred_check
      _
    $region15: #{tpu_custom_call.1} parent=1 // pred_check_branch
      %77 = sbr.rel (0) target = $region17
    $region16: #{tpu_custom_call.1} parent=1 // pred_region
      %78 = dma.done [#allocation3], 16
    $region17: #{tpu_custom_call.1} parent=1 // pred_fallthru
      _
    %79 = vsyncpa [#allocation3], 1

</llo_original>
